<compile_context>
chip_gen: v7x
topology: tpu7x:2x2x1
jax: 0.10.0
libtpu: 0.0.40
codegen_flags: <defaults>
</compile_context>

<pallas_src>
import functools

import jax
import jax.numpy as jnp
from jax import lax
from jax.experimental import pallas as pl
from jax.experimental.pallas import tpu as pltpu

EPS = 1e-5


# ----------------------------------------------------------------------------
# Hardware-aware sizing
# ----------------------------------------------------------------------------
def _vmem_capacity_bytes():
    try:
        cap = getattr(pltpu.get_tpu_info(), "vmem_capacity_bytes", None)
        if cap:
            return int(cap)
    except Exception:
        pass
    return 64 * 1024 * 1024            # conservative default (v7x-sized VMEM)


_VMEM_CAP = _vmem_capacity_bytes()
# Per pipelined buffer budget: ~1/8 of physical VMEM, clipped to [4, 16] MiB
# (16 MiB on v5e/v6e's 128 MiB VMEM, 8 MiB on v7x's 64 MiB).
_TILE_BUDGET_BYTES = int(min(max(_VMEM_CAP // 8, 4 << 20), 16 << 20))
# Scoped-VMEM limit handed to Mosaic: half of physical, capped at 64 MiB.
_VMEM_LIMIT_BYTES = int(min(_VMEM_CAP // 2, 64 << 20))


def _sublane_multiple(dtype):
    # Sub-32-bit dtypes pack along sublanes (bf16 vreg = [16,128]), so channel
    # tiles must be a multiple of the pack factor.
    return {4: 8, 2: 16, 1: 32}.get(jnp.dtype(dtype).itemsize, 8)


def _pick_c_tile(c, per_channel_bytes, m, budget):
    """Largest channel tile that (a) divides C, (b) is a multiple of the
    dtype's sublane pack factor (or equals C), (c) fits `budget`, and
    (d) leaves >= 2 grid steps when possible (megacore).  None if nothing
    fits the budget."""
    cands = [d for d in range(c, 0, -1)
             if c % d == 0 and (d % m == 0 or d == c)]
    fitting = [d for d in cands if d * per_channel_bytes <= budget]
    if not fitting:
        return None
    multi = [d for d in fitting if c // d >= 2]
    return multi[0] if multi else fitting[0]


# ----------------------------------------------------------------------------
# Fused BatchNorm2d (+ PReLU) kernels
# ----------------------------------------------------------------------------
def _affine_prelu(x, mean, var, gamma, beta, alpha):
    scale = lax.rsqrt(var + EPS) * gamma
    shift = beta - mean * scale
    y = x * scale + shift
    if alpha is not None:
        y = jnp.where(y >= 0.0, y, y * alpha)
    return y


def _bn_prelu_kernel(*refs, inv_count, with_prelu):
    """One-pass fused BatchNorm2d(+PReLU).  Block = (N, c_tile, HW): the whole
    batch x spatial extent of a channel slab is resident, so batch statistics
    are computed in a single pass (sum / sum-of-squares)."""
    if with_prelu:
        x_ref, g_ref, b_ref, a_ref, o_ref = refs
        alpha = a_ref[...]
    else:
        x_ref, g_ref, b_ref, o_ref = refs
        alpha = None
    x = x_ref[...].astype(jnp.float32)
    s = jnp.sum(x, axis=(0, 2), keepdims=True)
    ss = jnp.sum(x * x, axis=(0, 2), keepdims=True)
    mean = s * inv_count
    var = jnp.maximum(ss * inv_count - mean * mean, 0.0)   # cancellation clamp
    o_ref[...] = _affine_prelu(x, mean, var, g_ref[...], b_ref[...],
                               alpha).astype(o_ref.dtype)


def _bn_prelu_2phase_kernel(*refs, kn, inv_count, with_prelu):
    """Fallback for channel slabs too large for VMEM.  Grid axis 1 runs 2*kn
    steps: the first kn steps stream N-chunks and accumulate per-channel
    sum / sum-of-squares in VMEM scratch, the last kn steps revisit the same
    chunks and write the normalized (+PReLU) output."""
    if with_prelu:
        x_ref, g_ref, b_ref, a_ref, o_ref, sum_ref, ssq_ref = refs
        alpha = a_ref[...]
    else:
        x_ref, g_ref, b_ref, o_ref, sum_ref, ssq_ref = refs
        alpha = None
    step = pl.program_id(1)

    @pl.when(step == 0)
    def _():
        sum_ref[...] = jnp.zeros_like(sum_ref)
        ssq_ref[...] = jnp.zeros_like(ssq_ref)

    x = x_ref[...].astype(jnp.float32)

    @pl.when(step < kn)
    def _():
        sum_ref[...] += jnp.sum(x, axis=(0, 2), keepdims=True)
        ssq_ref[...] += jnp.sum(x * x, axis=(0, 2), keepdims=True)

    @pl.when(step >= kn)
    def _():
        mean = sum_ref[...] * inv_count
        var = jnp.maximum(ssq_ref[...] * inv_count - mean * mean, 0.0)
        o_ref[...] = _affine_prelu(x, mean, var, g_ref[...], b_ref[...],
                                   alpha).astype(o_ref.dtype)


def batchnorm2d_prelu(x, gamma, beta, alpha=None, *, tile_budget_bytes=None):
    """Training-mode BatchNorm2d (batch statistics, i.e. a freshly constructed
    nn.BatchNorm2d in train mode) fused with an optional per-channel PReLU,
    as a single Pallas call.  x: (N, C, H, W); gamma/beta/alpha: (C,)."""
    n, c, h, w = x.shape
    hw = h * w
    itemsize = jnp.dtype(x.dtype).itemsize
    m = _sublane_multiple(x.dtype)
    budget = _TILE_BUDGET_BYTES if tile_budget_bytes is None else tile_budget_bytes
    with_prelu = alpha is not None

    # Lane axis = full HW extent: no pad to 128, no post-slice.  The reshape is
    # a contiguous view, not an extra HBM pass.
    x3 = x.reshape(n, c, hw)
    params = [gamma.reshape(1, c, 1).astype(jnp.float32),
              beta.reshape(1, c, 1).astype(jnp.float32)]
    if with_prelu:
        params.append(alpha.reshape(1, c, 1).astype(jnp.float32))

    elems = n * c * hw
    flops = (9 if with_prelu else 7) * elems
    inv_count = 1.0 / float(n * hw)

    c_tile = _pick_c_tile(c, n * hw * itemsize, m, budget)
    if c_tile is not None:
        # One-pass path: one read + one write of the activation.
        out = pl.pallas_call(
            functools.partial(_bn_prelu_kernel, inv_count=inv_count,
                              with_prelu=with_prelu),
            out_shape=jax.ShapeDtypeStruct((n, c, hw), x.dtype),
            grid=(c // c_tile,),
            in_specs=[pl.BlockSpec((n, c_tile, hw), lambda i: (0, i, 0))]
                     + [pl.BlockSpec((1, c_tile, 1),
                                     lambda i: (0, i, 0))] * len(params),
            out_specs=pl.BlockSpec((n, c_tile, hw), lambda i: (0, i, 0)),
            compiler_params=pltpu.CompilerParams(
                dimension_semantics=("parallel",),
                vmem_limit_bytes=_VMEM_LIMIT_BYTES),
            cost_estimate=pl.CostEstimate(
                flops=flops, transcendentals=c,
                bytes_accessed=2 * elems * itemsize),
        )(x3, *params)
        return out.reshape(n, c, h, w)

    # Two-phase fallback: even the minimum channel tile exceeds the budget, so
    # additionally chunk the batch axis and make two passes over each channel
    # slab (stats accumulate, then normalize).  Costs one extra read of x.
    c_tile = m if c % m == 0 else c
    n_chunk = next((d for d in range(n, 0, -1)
                    if n % d == 0 and d * c_tile * hw * itemsize <= budget), 1)
    kn = n // n_chunk
    out = pl.pallas_call(
        functools.partial(_bn_prelu_2phase_kernel, kn=kn, inv_count=inv_count,
                          with_prelu=with_prelu),
        out_shape=jax.ShapeDtypeStruct((n, c, hw), x.dtype),
        grid=(c // c_tile, 2 * kn),
        in_specs=[pl.BlockSpec((n_chunk, c_tile, hw),
                               lambda i, s: (s % kn, i, 0))]
                 + [pl.BlockSpec((1, c_tile, 1),
                                 lambda i, s: (0, i, 0))] * len(params),
        out_specs=pl.BlockSpec((n_chunk, c_tile, hw),
                               lambda i, s: (jnp.maximum(s - kn, 0), i, 0)),
        scratch_shapes=[pltpu.VMEM((1, c_tile, 1), jnp.float32),
                        pltpu.VMEM((1, c_tile, 1), jnp.float32)],
        compiler_params=pltpu.CompilerParams(
            dimension_semantics=("parallel", "arbitrary"),
            vmem_limit_bytes=_VMEM_LIMIT_BYTES),
        cost_estimate=pl.CostEstimate(
            flops=flops, transcendentals=c,
            bytes_accessed=3 * elems * itemsize),
    )(x3, *params)
    return out.reshape(n, c, h, w)


def batchnorm2d_prelu_ref(x, gamma, beta, alpha=None):
    """Pure-JAX reference (PyTorch training-mode BatchNorm2d + PReLU)."""
    n, c, h, w = x.shape
    xf = x.astype(jnp.float32)
    inv = 1.0 / float(n * h * w)
    s = jnp.sum(xf, axis=(0, 2, 3), keepdims=True)
    ss = jnp.sum(xf * xf, axis=(0, 2, 3), keepdims=True)
    mean = s * inv
    var = jnp.maximum(ss * inv - mean * mean, 0.0)
    y = (xf - mean) * lax.rsqrt(var + EPS) * gamma.reshape(1, c, 1, 1) \
        + beta.reshape(1, c, 1, 1)
    if alpha is not None:
        y = jnp.where(y >= 0.0, y, y * alpha.reshape(1, c, 1, 1))
    return y.astype(x.dtype)


# ----------------------------------------------------------------------------
# Fused head: Linear(512 -> E, no bias) -> BatchNorm1d -> l2_norm
# ----------------------------------------------------------------------------
def _head_kernel(x_ref, w_ref, g_ref, b_ref, o_ref, *, inv_n):
    y = jnp.dot(x_ref[...].astype(jnp.float32), w_ref[...],
                preferred_element_type=jnp.float32)
    mean = jnp.sum(y, axis=0, keepdims=True) * inv_n
    var = jnp.maximum(jnp.sum(y * y, axis=0, keepdims=True) * inv_n
                      - mean * mean, 0.0)
    y = (y - mean) * lax.rsqrt(var + EPS) * g_ref[...] + b_ref[...]
    o_ref[...] = (y * lax.rsqrt(jnp.sum(y * y, axis=1, keepdims=True))
                  ).astype(o_ref.dtype)


def linear_bn_l2norm(x, w_t, gamma, beta):
    """x: (N, K); w_t: (K, E); gamma/beta: (E,).  Whole problem fits VMEM, so
    full-array blocks (no grid)."""
    n, k = x.shape
    e = w_t.shape[1]
    return pl.pallas_call(
        functools.partial(_head_kernel, inv_n=1.0 / float(n)),
        out_shape=jax.ShapeDtypeStruct((n, e), x.dtype),
        cost_estimate=pl.CostEstimate(
            flops=2 * n * k * e + 10 * n * e, transcendentals=e + n,
            bytes_accessed=4 * (n * k + k * e + 2 * e + n * e)),
    )(x, w_t.astype(jnp.float32), gamma.reshape(1, e).astype(jnp.float32),
      beta.reshape(1, e).astype(jnp.float32))


def linear_bn_l2norm_ref(x, w_t, gamma, beta):
    y = jnp.dot(x.astype(jnp.float32), w_t.astype(jnp.float32),
                precision=lax.Precision.HIGHEST)
    n = y.shape[0]
    mean = jnp.sum(y, axis=0, keepdims=True) / n
    var = jnp.maximum(jnp.sum(y * y, axis=0, keepdims=True) / n - mean * mean,
                      0.0)
    y = (y - mean) * lax.rsqrt(var + EPS) * gamma[None, :] + beta[None, :]
    y = y / jnp.sqrt(jnp.sum(y * y, axis=1, keepdims=True))
    return y.astype(x.dtype)


# ----------------------------------------------------------------------------
# MobileFaceNet: static architecture config + array-only parameter pytree
# ----------------------------------------------------------------------------
def _conv_cfg(in_c, out_c, kernel=(1, 1), stride=(1, 1), padding=(0, 0),
              groups=1, prelu=True):
    return dict(in_c=in_c, out_c=out_c, kernel=kernel, stride=stride,
                padding=padding, groups=groups, prelu=prelu)


def _dw_cfg(in_c, out_c, residual, kernel, stride, padding, groups):
    return dict(residual=residual,
                conv=_conv_cfg(in_c, groups),
                conv_dw=_conv_cfg(groups, groups, kernel, stride, padding,
                                  groups),
                project=_conv_cfg(groups, out_c, prelu=False))


MFN_ARCH = dict(
    conv1=_conv_cfg(3, 64, (3, 3), (2, 2), (1, 1)),
    conv2_dw=_conv_cfg(64, 64, (3, 3), (1, 1), (1, 1), 64),
    conv_23=_dw_cfg(64, 64, False, (3, 3), (2, 2), (1, 1), 128),
    conv_3=[_dw_cfg(64, 64, True, (3, 3), (1, 1), (1, 1), 128)] * 4,
    conv_34=_dw_cfg(64, 128, False, (3, 3), (2, 2), (1, 1), 256),
    conv_4=[_dw_cfg(128, 128, True, (3, 3), (1, 1), (1, 1), 256)] * 6,
    conv_45=_dw_cfg(128, 128, False, (3, 3), (2, 2), (1, 1), 512),
    conv_5=[_dw_cfg(128, 128, True, (3, 3), (1, 1), (1, 1), 256)] * 2,
    conv_6_sep=_conv_cfg(128, 512),
    conv_6_dw=_conv_cfg(512, 512, (7, 7), (1, 1), (0, 0), 512, prelu=False),
)


def _init_conv_block(key, cfg):
    k_w, k_g, k_b, k_a = jax.random.split(key, 4)
    kh, kw = cfg["kernel"]
    fan_in = (cfg["in_c"] // cfg["groups"]) * kh * kw
    p = dict(
        w=jax.random.normal(
            k_w, (cfg["out_c"], cfg["in_c"] // cfg["groups"], kh, kw),
            jnp.float32) * (2.0 / fan_in) ** 0.5,
        gamma=1.0 + 0.1 * jax.random.normal(k_g, (cfg["out_c"],), jnp.float32),
        beta=0.05 * jax.random.normal(k_b, (cfg["out_c"],), jnp.float32))
    if cfg["prelu"]:
        p["alpha"] = 0.25 + 0.05 * jax.random.normal(k_a, (cfg["out_c"],),
                                                     jnp.float32)
    return p


def _init_dw(key, cfg):
    k1, k2, k3 = jax.random.split(key, 3)
    return dict(conv=_init_conv_block(k1, cfg["conv"]),
                conv_dw=_init_conv_block(k2, cfg["conv_dw"]),
                project=_init_conv_block(k3, cfg["project"]))


def init_mobilefacenet(key, embedding_size):
    ks = jax.random.split(key, 13)
    return dict(
        conv1=_init_conv_block(ks[0], MFN_ARCH["conv1"]),
        conv2_dw=_init_conv_block(ks[1], MFN_ARCH["conv2_dw"]),
        conv_23=_init_dw(ks[2], MFN_ARCH["conv_23"]),
        conv_3=[_init_dw(k, c) for k, c in
                zip(jax.random.split(ks[3], 4), MFN_ARCH["conv_3"])],
        conv_34=_init_dw(ks[4], MFN_ARCH["conv_34"]),
        conv_4=[_init_dw(k, c) for k, c in
                zip(jax.random.split(ks[5], 6), MFN_ARCH["conv_4"])],
        conv_45=_init_dw(ks[6], MFN_ARCH["conv_45"]),
        conv_5=[_init_dw(k, c) for k, c in
                zip(jax.random.split(ks[7], 2), MFN_ARCH["conv_5"])],
        conv_6_sep=_init_conv_block(ks[8], MFN_ARCH["conv_6_sep"]),
        conv_6_dw=_init_conv_block(ks[9], MFN_ARCH["conv_6_dw"]),
        linear_w=jax.random.normal(ks[10], (embedding_size, 512), jnp.float32)
                 * (1.0 / 512.0) ** 0.5,
        bn_gamma=1.0 + 0.1 * jax.random.normal(ks[11], (embedding_size,),
                                               jnp.float32),
        bn_beta=0.05 * jax.random.normal(ks[12], (embedding_size,),
                                         jnp.float32),
    )


def _conv2d(x, w, stride, padding, groups):
    # TODO(synk): convolutions are executed by XLA, not a Pallas kernel.
    return lax.conv_general_dilated(
        x, w, window_strides=stride,
        padding=((padding[0], padding[0]), (padding[1], padding[1])),
        dimension_numbers=("NCHW", "OIHW", "NCHW"),
        feature_group_count=groups)


def _conv_block_fwd(cfg, p, x, use_pallas):
    # Conv_block (conv -> BN -> PReLU) or Linear_block (conv -> BN).
    x = _conv2d(x, p["w"], cfg["stride"], cfg["padding"], cfg["groups"])
    norm = batchnorm2d_prelu if use_pallas else batchnorm2d_prelu_ref
    return norm(x, p["gamma"], p["beta"], p.get("alpha"))


def _dw_fwd(cfg, p, x, use_pallas):
    y = _conv_block_fwd(cfg["conv"], p["conv"], x, use_pallas)
    y = _conv_block_fwd(cfg["conv_dw"], p["conv_dw"], y, use_pallas)
    y = _conv_block_fwd(cfg["project"], p["project"], y, use_pallas)
    return x + y if cfg["residual"] else y


def mobilefacenet_forward(params, x, use_pallas=True):
    a = MFN_ARCH
    out = _conv_block_fwd(a["conv1"], params["conv1"], x, use_pallas)
    out = _conv_block_fwd(a["conv2_dw"], params["conv2_dw"], out, use_pallas)
    out = _dw_fwd(a["conv_23"], params["conv_23"], out, use_pallas)
    for cfg, p in zip(a["conv_3"], params["conv_3"]):
        out = _dw_fwd(cfg, p, out, use_pallas)
    out = _dw_fwd(a["conv_34"], params["conv_34"], out, use_pallas)
    for cfg, p in zip(a["conv_4"], params["conv_4"]):
        out = _dw_fwd(cfg, p, out, use_pallas)
    out = _dw_fwd(a["conv_45"], params["conv_45"], out, use_pallas)
    for cfg, p in zip(a["conv_5"], params["conv_5"]):
        out = _dw_fwd(cfg, p, out, use_pallas)
    out = _conv_block_fwd(a["conv_6_sep"], params["conv_6_sep"], out, use_pallas)
    out = _conv_block_fwd(a["conv_6_dw"], params["conv_6_dw"], out, use_pallas)
    out = out.reshape(out.shape[0], -1)                     # Flatten
    w_t = params["linear_w"].T                              # Linear(512 -> E)
    head = linear_bn_l2norm if use_pallas else linear_bn_l2norm_ref
    return head(out, w_t, params["bn_gamma"], params["bn_beta"])


# ----------------------------------------------------------------------------
if __name__ == "__main__":
    root = jax.random.PRNGKey(0)
    k_bn, k_head, k_net, k_x = jax.random.split(root, 4)

    # ---- unit test: fused BatchNorm2d + PReLU kernel (both code paths) ----
    ct = 32
    xt = jax.random.normal(k_bn, (4, ct, 14, 14), jnp.float32) * 1.5 + 0.3
    gt = 1.0 + 0.1 * jnp.arange(ct, dtype=jnp.float32)
    bt = 0.05 * jnp.arange(ct, dtype=jnp.float32)
    at = 0.25 + 0.01 * jnp.arange(ct, dtype=jnp.float32)
    ref_bn = batchnorm2d_prelu_ref(xt, gt, bt, at)
    out_1p = jax.block_until_ready(batchnorm2d_prelu(xt, gt, bt, at))
    out_2p = jax.block_until_ready(
        batchnorm2d_prelu(xt, gt, bt, at, tile_budget_bytes=20_000))
    assert jnp.allclose(out_1p, ref_bn, atol=1e-4, rtol=1e-4), "one-pass BN"
    assert jnp.allclose(out_2p, ref_bn, atol=1e-4, rtol=1e-4), "two-phase BN"

    # ---- unit test: fused Linear -> BatchNorm1d -> l2_norm head ----
    kh1, kh2 = jax.random.split(k_head)
    xh = jax.random.normal(kh1, (8, 512), jnp.float32)
    wh = jax.random.normal(kh2, (512, 32), jnp.float32) * (1.0 / 512.0) ** 0.5
    gh = 1.0 + 0.1 * jnp.arange(32, dtype=jnp.float32)
    bh = 0.02 * jnp.arange(32, dtype=jnp.float32)
    out_h = jax.block_until_ready(linear_bn_l2norm(xh, wh, gh, bh))
    ref_h = linear_bn_l2norm_ref(xh, wh, gh, bh)
    assert jnp.allclose(out_h, ref_h, atol=1e-2, rtol=1e-2), "head kernel"

    # ---- full MobileFaceNet forward: Pallas norm/act/head vs pure-JAX ref ----
    EMB = 64
    params = init_mobilefacenet(k_net, EMB)
    # 112x112 is the spatial size the architecture implies (7x7 feature map
    # before the global 7x7 depthwise conv); batch 8 keeps per-layer blocks
    # small and the sublane dim of the head matmul aligned.
    x = jax.random.normal(k_x, (8, 3, 112, 112), jnp.float32)

    fwd = jax.jit(mobilefacenet_forward, static_argnames=("use_pallas",))
    out = jax.block_until_ready(fwd(params, x, use_pallas=True))
    ref = jax.block_until_ready(fwd(params, x, use_pallas=False))

    assert out.shape == (8, EMB)
    assert bool(jnp.all(jnp.isfinite(out)))
    norms = jnp.sqrt(jnp.sum(out.astype(jnp.float32) ** 2, axis=1))
    assert jnp.allclose(norms, 1.0, atol=1e-3), "embeddings not l2-normalized"
    # Loose tolerance: BatchNorm over a small batch amplifies the (benign)
    # float32 reduction-order differences accumulated across ~50 layers.
    err = float(jnp.max(jnp.abs(out - ref)))
    assert err < 2e-2, f"full-network mismatch: max abs err = {err}"
    print("KERNEL_OK")
</pallas_src>

<mosaic_0001>
module attributes {stable_mosaic.version = 11 : i64} {
  func.func @_bn_prelu_kernel(%arg0: i32, %arg1: memref<4x16x196xf32, #tpu.memory_space<vmem>>, %arg2: memref<1x16x1xf32, #tpu.memory_space<vmem>>, %arg3: memref<1x16x1xf32, #tpu.memory_space<vmem>>, %arg4: memref<1x16x1xf32, #tpu.memory_space<vmem>>, %arg5: memref<4x16x196xf32, #tpu.memory_space<vmem>>) attributes {dimension_semantics = [#tpu.dimension_semantics<parallel>], iteration_bounds = array<i64: 2>, scalar_prefetch = 0 : i64, scratch_operands = 0 : i64, tpu.core_type = #tpu.core_type<tc>, window_params = [{transform_indices = @transform_0, window_bounds = array<i64: 4, 16, 196>}, {transform_indices = @transform_1, window_bounds = array<i64: 1, 16, 1>}, {transform_indices = @transform_2, window_bounds = array<i64: 1, 16, 1>}, {transform_indices = @transform_3, window_bounds = array<i64: 1, 16, 1>}, {transform_indices = @transform_4, window_bounds = array<i64: 4, 16, 196>}]} {
    %c0 = arith.constant 0 : index
    %c0_0 = arith.constant 0 : index
    %c0_1 = arith.constant 0 : index
    %0 = vector.load %arg4[%c0, %c0_0, %c0_1] : memref<1x16x1xf32, #tpu.memory_space<vmem>>, vector<1x16x1xf32>
    %c0_2 = arith.constant 0 : index
    %c0_3 = arith.constant 0 : index
    %c0_4 = arith.constant 0 : index
    %1 = vector.load %arg1[%c0_2, %c0_3, %c0_4] : memref<4x16x196xf32, #tpu.memory_space<vmem>>, vector<4x16x196xf32>
    %cst = arith.constant dense<0.000000e+00> : vector<16xf32>
    %2 = vector.multi_reduction <add>, %1, %cst [0, 2] : vector<4x16x196xf32> to vector<16xf32>
    %3 = vector.shape_cast %2 : vector<16xf32> to vector<1x16x1xf32>
    %4 = arith.mulf %1, %1 : vector<4x16x196xf32>
    %cst_5 = arith.constant dense<0.000000e+00> : vector<16xf32>
    %5 = vector.multi_reduction <add>, %4, %cst_5 [0, 2] : vector<4x16x196xf32> to vector<16xf32>
    %6 = vector.shape_cast %5 : vector<16xf32> to vector<1x16x1xf32>
    %cst_6 = arith.constant 0.00127551018 : f32
    %7 = vector.broadcast %cst_6 : f32 to vector<1x16x1xf32>
    %8 = arith.mulf %3, %7 : vector<1x16x1xf32>
    %cst_7 = arith.constant 0.00127551018 : f32
    %9 = vector.broadcast %cst_7 : f32 to vector<1x16x1xf32>
    %10 = arith.mulf %6, %9 : vector<1x16x1xf32>
    %11 = arith.mulf %8, %8 : vector<1x16x1xf32>
    %12 = arith.subf %10, %11 : vector<1x16x1xf32>
    %cst_8 = arith.constant 0.000000e+00 : f32
    %13 = vector.broadcast %cst_8 : f32 to vector<1x16x1xf32>
    %14 = arith.maximumf %12, %13 : vector<1x16x1xf32>
    %c0_9 = arith.constant 0 : index
    %c0_10 = arith.constant 0 : index
    %c0_11 = arith.constant 0 : index
    %15 = vector.load %arg2[%c0_9, %c0_10, %c0_11] : memref<1x16x1xf32, #tpu.memory_space<vmem>>, vector<1x16x1xf32>
    %c0_12 = arith.constant 0 : index
    %c0_13 = arith.constant 0 : index
    %c0_14 = arith.constant 0 : index
    %16 = vector.load %arg3[%c0_12, %c0_13, %c0_14] : memref<1x16x1xf32, #tpu.memory_space<vmem>>, vector<1x16x1xf32>
    %cst_15 = arith.constant 9.99999974E-6 : f32
    %17 = vector.broadcast %cst_15 : f32 to vector<1x16x1xf32>
    %18 = arith.addf %14, %17 : vector<1x16x1xf32>
    %19 = math.rsqrt %18 : vector<1x16x1xf32>
    %20 = arith.mulf %19, %15 : vector<1x16x1xf32>
    %21 = arith.mulf %8, %20 : vector<1x16x1xf32>
    %22 = arith.subf %16, %21 : vector<1x16x1xf32>
    %23 = vector.broadcast %20 : vector<1x16x1xf32> to vector<4x16x196xf32>
    %24 = arith.mulf %1, %23 : vector<4x16x196xf32>
    %25 = vector.broadcast %22 : vector<1x16x1xf32> to vector<4x16x196xf32>
    %26 = arith.addf %24, %25 : vector<4x16x196xf32>
    %cst_16 = arith.constant 0.000000e+00 : f32
    %27 = vector.broadcast %cst_16 : f32 to vector<4x16x196xf32>
    %28 = arith.cmpf oge, %26, %27 : vector<4x16x196xf32>
    %29 = vector.broadcast %0 : vector<1x16x1xf32> to vector<4x16x196xf32>
    %30 = arith.mulf %26, %29 : vector<4x16x196xf32>
    %31 = arith.select %28, %26, %30 : vector<4x16x196xi1>, vector<4x16x196xf32>
    %c0_17 = arith.constant 0 : index
    %c0_18 = arith.constant 0 : index
    %c0_19 = arith.constant 0 : index
    %32 = vector.load %arg5[%c0_17, %c0_18, %c0_19] : memref<4x16x196xf32, #tpu.memory_space<vmem>>, vector<4x16x196xf32>
    tpu.vector_store %arg5[%c0_17, %c0_18, %c0_19], %31 {strides = array<i32>} : memref<4x16x196xf32, #tpu.memory_space<vmem>>, vector<4x16x196xf32>,
    return
  }
  func.func @transform_0(%arg0: i32) -> (i32, i32, i32) {
    %c0_i32 = arith.constant 0 : i32
    %c0_i32_0 = arith.constant 0 : i32
    %c0_i32_1 = arith.constant 0 : i32
    return %c0_i32, %arg0, %c0_i32_0 : i32, i32, i32
  }
  func.func @transform_1(%arg0: i32) -> (i32, i32, i32) {
    %c0_i32 = arith.constant 0 : i32
    %c0_i32_0 = arith.constant 0 : i32
    %c0_i32_1 = arith.constant 0 : i32
    return %c0_i32, %arg0, %c0_i32_0 : i32, i32, i32
  }
  func.func @transform_2(%arg0: i32) -> (i32, i32, i32) {
    %c0_i32 = arith.constant 0 : i32
    %c0_i32_0 = arith.constant 0 : i32
    %c0_i32_1 = arith.constant 0 : i32
    return %c0_i32, %arg0, %c0_i32_0 : i32, i32, i32
  }
  func.func @transform_3(%arg0: i32) -> (i32, i32, i32) {
    %c0_i32 = arith.constant 0 : i32
    %c0_i32_0 = arith.constant 0 : i32
    %c0_i32_1 = arith.constant 0 : i32
    return %c0_i32, %arg0, %c0_i32_0 : i32, i32, i32
  }
  func.func @transform_4(%arg0: i32) -> (i32, i32, i32) {
    %c0_i32 = arith.constant 0 : i32
    %c0_i32_0 = arith.constant 0 : i32
    %c0_i32_1 = arith.constant 0 : i32
    return %c0_i32, %arg0, %c0_i32_0 : i32, i32, i32
  }
}

</mosaic_0001>

<llo_original>
// kernel: tpu_custom_call.1
$region0: #{tpu_custom_call.1}
  #allocation0 [shape = 'u32[]', space=smem, size = 0x4, offset = 0x4, fixed_abs, tag = 'smem constant byte address 0x4 - core index']
  #allocation1 [shape = 'u32[144,128]{1,0:T(1,128)}', space=vmem, size = 0x12000, scoped, tag = 'internal scratch']
  #allocation6 [shape = 's32[]', space=sflag, size = 0x4, offset = 0, fixed_abs, tag = 'sflag constant byte address 0x0 - dummy sync flag']
  #allocation8 [shape = 's32[]', space=sflag, size = 0x4, offset = 0, fixed_abs, tag = 'sflag constant byte address 0x0 - dummy sync flag']
  %s0 = inlined_call_operand.hbm [shape: f32[4,32,196], index: 0, kind: input, shape index: {}]
  %s1 = inlined_call_operand.vmem [shape: f32[1,32,1], index: 1, kind: input, shape index: {}]
  %s2 = inlined_call_operand.vmem [shape: f32[1,32,1], index: 2, kind: input, shape index: {}]
  %s3 = inlined_call_operand.vmem [shape: f32[1,32,1], index: 3, kind: input, shape index: {}]
  %s4 = inlined_call_operand.hbm [shape: f32[4,32,196], index: 4, kind: output, shape index: {}]
  %s5 = sld [smem:[#allocation0]]
  $region53: #{tpu_custom_call.1} parent=0
    _
  %s7 = ssub.s32 1, %s5
  %s8 = scalar_select 0, %s7, %s5
  $region1: #{tpu_custom_call.1} parent=0
    #allocation2 [shape = 'u8[131072]{0}', space=vmem, size = 0x20000, scoped, tag = 'input window, operand 0']
    #allocation3 [shape = 's32[2]{0}', space=sflag, size = 0x8, scoped, tag = 'scoped memory for tpu_custom_call.1']
    #allocation4 [shape = 's32[2]{0}', space=sflag, size = 0x8, scoped, tag = 'scoped memory for tpu_custom_call.1']
    #allocation5 [shape = 'u8[131072]{0}', space=vmem, size = 0x20000, scoped, tag = 'output window, operand 0']
    %9 = vsyncpa [#allocation3], 0
    %s10 = scalar_lea.sflag [#allocation3], 1
    %11 = vsyncpa %s10, 0
    %12 = vsyncpa [#allocation4], 0
    %s13 = scalar_lea.sflag [#allocation4], 1
    %14 = vsyncpa %s13, 0
    loop: start=0, step=1, limit=4
    $region2: #{tpu_custom_call.1} parent=1 // loop_pre_header
      _
    $region3: #{tpu_custom_call.1} parent=1 // loop_header
      %s16 = sphi 0, %s20
      %p17 = scmp.ge.s32.totalorder %s16, 4
      %s26 = sphi 0, %s28
      %s29 = sphi 0, %s26
      %s30 = sphi 0, %s29
      %s46 = sphi 0, %s30
      %s52 = sphi 0, %s54
      %s55 = sphi 0, %s52
      %s56 = sphi 0, %s55
      %s72 = sphi 0, %s56
      %s78 = sphi 0, %s80
      %s81 = sphi 0, %s78
      %s82 = sphi 0, %s81
      %s98 = sphi 0, %s82
      %s104 = sphi 0, %s106
      %s107 = sphi 0, %s104
      %s108 = sphi 0, %s107
      %s124 = sphi 0, %s108
      %s130 = sphi 0, %s132
      %s133 = sphi 0, %s130
      %s134 = sphi 0, %s133
      %s150 = sphi 0, %s134
    $region4: #{tpu_custom_call.1} parent=1 // loop_header_branch
      %19 = sbr.rel (%p17) target = $region8
    $region5: #{tpu_custom_call.1} parent=1 // loop_body
      %s21 = ssub.s32 %s16, 1
      %s22 = ssub.s32 %s16, 2
      %s23 = sadd.s32 %s16, 1
      %s24 = ssub.s32 %s16, %s23
      %p25 = scmp.eq.s32.totalorder %s24, 0
      %s27 = sadd.s32 %s26, 1
      %s28 = scalar_select %p25, %s26, %s27
      %p31 = pneg %p25
      %p32 = scmp.eq.s32.totalorder %s16, 1
      %p33 = por %p31, %p32
      %p34 = scmp.ne.s32.totalorder %s26, %s29
      %p35 = scmp.eq.s32.totalorder %s16, 0
      %p36 = por %p34, %p35
      %p37 = scmp.ne.s32.totalorder %s26, %s29
      %p38 = scmp.eq.s32.totalorder %s21, 1
      %p39 = por %p37, %p38
      %p40 = scmp.ne.s32.totalorder %s29, %s30
      %p41 = scmp.eq.s32.totalorder %s21, 0
      %p42 = por %p40, %p41
      %p43 = scmp.ne.s32.totalorder %s29, %s30
      %p44 = scmp.eq.s32.totalorder %s22, 1
      %p45 = por %p43, %p44
      %p47 = scmp.ne.s32.totalorder %s30, %s46
      %p48 = scmp.eq.s32.totalorder %s22, 0
      %p49 = por %p47, %p48
      %s50 = ssub.s32 %s16, %s23
      %p51 = scmp.eq.s32.totalorder %s50, 0
      %s53 = sadd.s32 %s52, 1
      %s54 = scalar_select %p51, %s52, %s53
      %p57 = pneg %p51
      %p58 = scmp.eq.s32.totalorder %s16, 1
      %p59 = por %p57, %p58
      %p60 = scmp.ne.s32.totalorder %s52, %s55
      %p61 = scmp.eq.s32.totalorder %s16, 0
      %p62 = por %p60, %p61
      %p63 = scmp.ne.s32.totalorder %s52, %s55
      %p64 = scmp.eq.s32.totalorder %s21, 1
      %p65 = por %p63, %p64
      %p66 = scmp.ne.s32.totalorder %s55, %s56
      %p67 = scmp.eq.s32.totalorder %s21, 0
      %p68 = por %p66, %p67
      %p69 = scmp.ne.s32.totalorder %s55, %s56
      %p70 = scmp.eq.s32.totalorder %s22, 1
      %p71 = por %p69, %p70
      %p73 = scmp.ne.s32.totalorder %s56, %s72
      %p74 = scmp.eq.s32.totalorder %s22, 0
      %p75 = por %p73, %p74
      %s76 = ssub.s32 %s16, %s23
      %p77 = scmp.eq.s32.totalorder %s76, 0
      %s79 = sadd.s32 %s78, 1
      %s80 = scalar_select %p77, %s78, %s79
      %p83 = pneg %p77
      %p84 = scmp.eq.s32.totalorder %s16, 1
      %p85 = por %p83, %p84
      %p86 = scmp.ne.s32.totalorder %s78, %s81
      %p87 = scmp.eq.s32.totalorder %s16, 0
      %p88 = por %p86, %p87
      %p89 = scmp.ne.s32.totalorder %s78, %s81
      %p90 = scmp.eq.s32.totalorder %s21, 1
      %p91 = por %p89, %p90
      %p92 = scmp.ne.s32.totalorder %s81, %s82
      %p93 = scmp.eq.s32.totalorder %s21, 0
      %p94 = por %p92, %p93
      %p95 = scmp.ne.s32.totalorder %s81, %s82
      %p96 = scmp.eq.s32.totalorder %s22, 1
      %p97 = por %p95, %p96
      %p99 = scmp.ne.s32.totalorder %s82, %s98
      %p100 = scmp.eq.s32.totalorder %s22, 0
      %p101 = por %p99, %p100
      %s102 = ssub.s32 %s16, %s23
      %p103 = scmp.eq.s32.totalorder %s102, 0
      %s105 = sadd.s32 %s104, 1
      %s106 = scalar_select %p103, %s104, %s105
      %p109 = pneg %p103
      %p110 = scmp.eq.s32.totalorder %s16, 1
      %p111 = por %p109, %p110
      %p112 = scmp.ne.s32.totalorder %s104, %s107
      %p113 = scmp.eq.s32.totalorder %s16, 0
      %p114 = por %p112, %p113
      %p115 = scmp.ne.s32.totalorder %s104, %s107
      %p116 = scmp.eq.s32.totalorder %s21, 1
      %p117 = por %p115, %p116
      %p118 = scmp.ne.s32.totalorder %s107, %s108
      %p119 = scmp.eq.s32.totalorder %s21, 0
      %p120 = por %p118, %p119
      %p121 = scmp.ne.s32.totalorder %s107, %s108
      %p122 = scmp.eq.s32.totalorder %s22, 1
      %p123 = por %p121, %p122
      %p125 = scmp.ne.s32.totalorder %s108, %s124
      %p126 = scmp.eq.s32.totalorder %s22, 0
      %p127 = por %p125, %p126
      %s128 = ssub.s32 %s16, %s23
      %p129 = scmp.eq.s32.totalorder %s128, 0
      %s131 = sadd.s32 %s130, 1
      %s132 = scalar_select %p129, %s130, %s131
      %p135 = pneg %p129
      %p136 = scmp.eq.s32.totalorder %s16, 1
      %p137 = por %p135, %p136
      %p138 = scmp.ne.s32.totalorder %s130, %s133
      %p139 = scmp.eq.s32.totalorder %s16, 0
      %p140 = por %p138, %p139
      %p141 = scmp.ne.s32.totalorder %s130, %s133
      %p142 = scmp.eq.s32.totalorder %s21, 1
      %p143 = por %p141, %p142
      %p144 = scmp.ne.s32.totalorder %s133, %s134
      %p145 = scmp.eq.s32.totalorder %s21, 0
      %p146 = por %p144, %p145
      %p147 = scmp.ne.s32.totalorder %s133, %s134
      %p148 = scmp.eq.s32.totalorder %s22, 1
      %p149 = por %p147, %p148
      %p151 = scmp.ne.s32.totalorder %s134, %s150
      %p152 = scmp.eq.s32.totalorder %s22, 0
      %p153 = por %p151, %p152
      %p154 = scmp.le.s32.totalorder 1, %s16
      %p155 = scmp.lt.s32.totalorder %s16, 3
      %p156 = pnand %p154, %p155
      %p157 = pneg %p156
      // Predicated region
      $region9: #{tpu_custom_call.1} parent=5 // pred_check
        _
      $region10: #{tpu_custom_call.1} parent=5 // pred_check_branch
        %159 = sbr.rel (%p156) target = $region12
      $region11: #{tpu_custom_call.1} parent=5 // pred_region
        %s160 = ssub.s32 %s16, 1
      $region12: #{tpu_custom_call.1} parent=5 // pred_fallthru
        _
      %p161 = scmp.lt.s32.totalorder %s16, 2
      // Predicated region
      $region13: #{tpu_custom_call.1} parent=5 // pred_check
        %p162 = pneg %p161
      $region14: #{tpu_custom_call.1} parent=5 // pred_check_branch
        %164 = sbr.rel (%p162) target = $region16
      $region15: #{tpu_custom_call.1} parent=5 // pred_region
        // Predicated region
        $region17: #{tpu_custom_call.1} parent=15 // pred_check
          %p165 = pneg %p36
        $region18: #{tpu_custom_call.1} parent=15 // pred_check_branch
          %167 = sbr.rel (%p165) target = $region20
        $region19: #{tpu_custom_call.1} parent=15 // pred_region
          #allocation7 [shape = 'u32[6]{0}', space=smem, size = 0x18, scoped, tag = 'DMA stride descriptor']
          %s168 = sand.u32 %s26, 1
          %s169 = scalar_lea.sflag [#allocation3], %s168
          %s170 = sand.u32 %s26, 1
          %s171 = smul.addr %s170, 128
          %s172 = scalar_lea.vmem [#allocation2], %s171
          %s173 = smul.u32 2, %s16
          %s175 = ssub.s32 2048, 2048
          %176 = vsyncadd %s169, %s175
          %s177 = smul.addr %s173, 2
          %s178 = smul.addr %s177, 128
          %s179 = scalar_lea.hbm %s0, %s178
          %s181 = sshll.u32 1, 14
          %s182 = sxor.u32 4294967295, %s181
          %s184 = sld [smem:[#allocation0]]
          %s185 = sadd.s32 2, %s184
          %s187 = sshll.u32 7, 26
          %s188 = sxor.u32 4294967295, %s187
          %s189 = sand.u32 0, %s188
          %s190 = sshll.u32 %s185, 26
          %s191 = sor.u32 %s189, %s190
          %s192 = sshll.u32 %s172, 4
          %s193 = int_to_ptr.vmem [resolvable:$true] %s192
          %199 = sst [smem:[#allocation7]] 1024
          %s200 = scalar_lea.smem [#allocation7], 1
          %201 = sst [smem:[%s200]] 512
          %s202 = scalar_lea.smem [#allocation7], 2
          %203 = sst [smem:[%s202]] 2
          %s204 = scalar_lea.smem [#allocation7], 3
          %205 = sst [smem:[%s204]] 256
          %s206 = scalar_lea.smem [#allocation7], 4
          %207 = sst [smem:[%s206]] 256
          %s208 = scalar_lea.smem [#allocation7], 5
          %209 = sst [smem:[%s208]] 16
          %211 = dma.general %s179, 2048, %s193, %s169, [#allocation6], [#allocation7], %s191, 0
        $region20: #{tpu_custom_call.1} parent=15 // pred_fallthru
          _
        // Predicated region
        $region21: #{tpu_custom_call.1} parent=15 // pred_check
          %p212 = pneg %p62
        $region22: #{tpu_custom_call.1} parent=15 // pred_check_branch
          %214 = sbr.rel (%p212) target = $region24
        $region23: #{tpu_custom_call.1} parent=15 // pred_region
          %s215 = smul.u32 2, %s16
          %p216 = scmp.lt.s32.totalorder %s215, 3
          %s217 = scalar_select %p216, %s215, 3
          %s218 = smul.addr %s217, 8
          %s219 = scalar_lea.vmem %s1, %s218
          %s220 = smul.u32 2, %s16
        $region24: #{tpu_custom_call.1} parent=15 // pred_fallthru
          _
        // Predicated region
        $region25: #{tpu_custom_call.1} parent=15 // pred_check
          %p221 = pneg %p88
        $region26: #{tpu_custom_call.1} parent=15 // pred_check_branch
          %223 = sbr.rel (%p221) target = $region28
        $region27: #{tpu_custom_call.1} parent=15 // pred_region
          %s224 = smul.u32 2, %s16
          %p225 = scmp.lt.s32.totalorder %s224, 3
          %s226 = scalar_select %p225, %s224, 3
          %s227 = smul.addr %s226, 8
          %s228 = scalar_lea.vmem %s2, %s227
          %s229 = smul.u32 2, %s16
        $region28: #{tpu_custom_call.1} parent=15 // pred_fallthru
          _
        // Predicated region
        $region29: #{tpu_custom_call.1} parent=15 // pred_check
          %p230 = pneg %p114
        $region30: #{tpu_custom_call.1} parent=15 // pred_check_branch
          %232 = sbr.rel (%p230) target = $region32
        $region31: #{tpu_custom_call.1} parent=15 // pred_region
          %s233 = smul.u32 2, %s16
          %p234 = scmp.lt.s32.totalorder %s233, 3
          %s235 = scalar_select %p234, %s233, 3
          %s236 = smul.addr %s235, 8
          %s237 = scalar_lea.vmem %s3, %s236
          %s238 = smul.u32 2, %s16
        $region32: #{tpu_custom_call.1} parent=15 // pred_fallthru
          _
      $region16: #{tpu_custom_call.1} parent=5 // pred_fallthru
        _
      %p239 = scmp.le.s32.totalorder 1, %s16
      %p240 = scmp.lt.s32.totalorder %s16, 3
      %p241 = pnand %p239, %p240
      %p242 = pneg %p241
      // Predicated region
      $region33: #{tpu_custom_call.1} parent=5 // pred_check
        _
      $region34: #{tpu_custom_call.1} parent=5 // pred_check_branch
        %244 = sbr.rel (%p241) target = $region36
      $region35: #{tpu_custom_call.1} parent=5 // pred_region
        %s245 = ssub.s32 %s16, 1
        %s246 = sand.u32 %s29, 1
        %s247 = scalar_lea.sflag [#allocation3], %s246
        %s248 = sand.u32 %s29, 1
        %s249 = smul.addr %s248, 128
        %s250 = scalar_lea.vmem [#allocation2], %s249
        // Predicated region
        $region37: #{tpu_custom_call.1} parent=35 // pred_check
          %p251 = pneg %p42
        $region38: #{tpu_custom_call.1} parent=35 // pred_check_branch
          %253 = sbr.rel (%p251) target = $region40
        $region39: #{tpu_custom_call.1} parent=35 // pred_region
          %254 = dma.done %s247, 2048
        $region40: #{tpu_custom_call.1} parent=35 // pred_fallthru
          _
        %s255 = sand.u32 %s29, 1
        %s256 = scalar_lea.sflag [#allocation3], %s255
        %s257 = sand.u32 %s29, 1
        %s258 = smul.addr %s257, 128
        %s259 = scalar_lea.vmem [#allocation2], %s258
        %p260 = pneg %p42
        %p261 = pneg %p39
        %s262 = smul.u32 2, %s21
        %p263 = scmp.lt.s32.totalorder %s262, 3
        %s264 = scalar_select %p263, %s262, 3
        %s265 = smul.addr %s264, 8
        %s266 = scalar_lea.vmem %s1, %s265
        %p267 = pneg %p68
        %p268 = pneg %p65
        %s269 = smul.u32 2, %s21
        %p270 = scmp.lt.s32.totalorder %s269, 3
        %s271 = scalar_select %p270, %s269, 3
        %s272 = smul.addr %s271, 8
        %s273 = scalar_lea.vmem %s2, %s272
        %p274 = pneg %p94
        %p275 = pneg %p91
        %s276 = smul.u32 2, %s21
        %p277 = scmp.lt.s32.totalorder %s276, 3
        %s278 = scalar_select %p277, %s276, 3
        %s279 = smul.addr %s278, 8
        %s280 = scalar_lea.vmem %s3, %s279
        %p281 = pneg %p120
        %p282 = pneg %p117
        %p283 = pneg %p146
        %p284 = pneg %p143
        %s285 = sand.u32 %s133, 1
        %s286 = scalar_lea.sflag [#allocation4], %s285
        %s287 = sand.u32 %s133, 1
        %s288 = smul.addr %s287, 128
        %s289 = scalar_lea.vmem [#allocation5], %s288
        %s290 = smul.u32 2, %s21
        %s291 = smul.u32 2, %s21
        %p292 = scmp.lt.s32.totalorder %s291, 3
        %s293 = scalar_select %p292, %s291, 3
        %s294 = smul.addr %s293, 8
        %s295 = scalar_lea.vmem %s1, %s294
        %s296 = smul.u32 2, %s21
        %s297 = smul.u32 2, %s21
        %p298 = scmp.lt.s32.totalorder %s297, 3
        %s299 = scalar_select %p298, %s297, 3
        %s300 = smul.addr %s299, 8
        %s301 = scalar_lea.vmem %s2, %s300
        %s302 = smul.u32 2, %s21
        %s303 = smul.u32 2, %s21
        %p304 = scmp.lt.s32.totalorder %s303, 3
        %s305 = scalar_select %p304, %s303, 3
        %s306 = smul.addr %s305, 8
        %s307 = scalar_lea.vmem %s3, %s306
        %s308 = smul.u32 2, %s21
        %s309 = smul.u32 2, %s21
        %v310 = vld [vmem:[%s307] sm:$0xff]
        %v311 = vld [vmem:[%s307 + $0x8] sm:$0xff]
        %v312 = vld [vmem:[%s250] sm:$0xff]
        %v313 = vld [vmem:[%s250 + $0x8] sm:$0xff]
        %v314 = vld [vmem:[%s250 + $0x10] sm:$0xff]
        %v315 = vld [vmem:[%s250 + $0x18] sm:$0xff]
        %v316 = vld [vmem:[%s250 + $0x20] sm:$0xff]
        %v317 = vld [vmem:[%s250 + $0x28] sm:$0xff]
        %v318 = vld [vmem:[%s250 + $0x30] sm:$0xff]
        %v319 = vld [vmem:[%s250 + $0x38] sm:$0xff]
        %v320 = vld [vmem:[%s250 + $0x40] sm:$0xff]
        %v321 = vld [vmem:[%s250 + $0x48] sm:$0xff]
        %v322 = vld [vmem:[%s250 + $0x50] sm:$0xff]
        %v323 = vld [vmem:[%s250 + $0x58] sm:$0xff]
        %v324 = vld [vmem:[%s250 + $0x60] sm:$0xff]
        %v325 = vld [vmem:[%s250 + $0x68] sm:$0xff]
        %v326 = vld [vmem:[%s250 + $0x70] sm:$0xff]
        %v327 = vld [vmem:[%s250 + $0x78] sm:$0xff]
        %vm328 = vcmask 556032
        %v329 = vsel %vm328, %v313, 0.0
        %v330 = vadd.f32 %v312, %v329
        %v331 = vadd.f32 %v330, %v316
        %v332 = vsel %vm328, %v317, 0.0
        %v333 = vadd.f32 %v331, %v332
        %v334 = vadd.f32 %v333, %v320
        %v335 = vsel %vm328, %v321, 0.0
        %v336 = vadd.f32 %v334, %v335
        %v337 = vadd.f32 %v336, %v324
        %v338 = vsel %vm328, %v325, 0.0
        %v339 = vadd.f32 %v337, %v338
        %340 = vadd.xlane.f32.xlu0 %v339
        %v341 = vpop.xlane.xlu0 %340
        %v342 = vsel %vm328, %v315, 0.0
        %v343 = vadd.f32 %v314, %v342
        %v344 = vadd.f32 %v343, %v318
        %v345 = vsel %vm328, %v319, 0.0
        %v346 = vadd.f32 %v344, %v345
        %v347 = vadd.f32 %v346, %v322
        %v348 = vsel %vm328, %v323, 0.0
        %v349 = vadd.f32 %v347, %v348
        %v350 = vadd.f32 %v349, %v326
        %v351 = vsel %vm328, %v327, 0.0
        %v352 = vadd.f32 %v350, %v351
        %353 = vadd.xlane.f32.xlu0 %v352
        %v354 = vpop.xlane.xlu0 %353
        %v355 = vmul.f32 %v312, %v312
        %v356 = vmul.f32 %v313, %v313
        %v357 = vmul.f32 %v314, %v314
        %v358 = vmul.f32 %v315, %v315
        %v359 = vmul.f32 %v316, %v316
        %v360 = vmul.f32 %v317, %v317
        %v361 = vmul.f32 %v318, %v318
        %v362 = vmul.f32 %v319, %v319
        %v363 = vmul.f32 %v320, %v320
        %v364 = vmul.f32 %v321, %v321
        %v365 = vmul.f32 %v322, %v322
        %v366 = vmul.f32 %v323, %v323
        %v367 = vmul.f32 %v324, %v324
        %v368 = vmul.f32 %v325, %v325
        %v369 = vmul.f32 %v326, %v326
        %v370 = vmul.f32 %v327, %v327
        %v371 = vsel %vm328, %v356, 0.0
        %v372 = vadd.f32 %v355, %v371
        %v373 = vadd.f32 %v372, %v359
        %v374 = vsel %vm328, %v360, 0.0
        %v375 = vadd.f32 %v373, %v374
        %v376 = vadd.f32 %v375, %v363
        %v377 = vsel %vm328, %v364, 0.0
        %v378 = vadd.f32 %v376, %v377
        %v379 = vadd.f32 %v378, %v367
        %v380 = vsel %vm328, %v368, 0.0
        %v381 = vadd.f32 %v379, %v380
        %382 = vadd.xlane.f32.xlu0 %v381
        %v383 = vpop.xlane.xlu0 %382
        %v384 = vsel %vm328, %v358, 0.0
        %v385 = vadd.f32 %v357, %v384
        %v386 = vadd.f32 %v385, %v361
        %v387 = vsel %vm328, %v362, 0.0
        %v388 = vadd.f32 %v386, %v387
        %v389 = vadd.f32 %v388, %v365
        %v390 = vsel %vm328, %v366, 0.0
        %v391 = vadd.f32 %v389, %v390
        %v392 = vadd.f32 %v391, %v369
        %v393 = vsel %vm328, %v370, 0.0
        %v394 = vadd.f32 %v392, %v393
        %395 = vadd.xlane.f32.xlu0 %v394
        %v396 = vpop.xlane.xlu0 %395
        %v397 = vmul.f32 %v341, 0.0012755102
        %v398 = vmul.f32 %v354, 0.0012755102
        %v399 = vmul.f32 %v383, 0.0012755102
        %v400 = vmul.f32 %v396, 0.0012755102
        %v401 = vmul.f32 %v397, %v397
        %v402 = vmul.f32 %v398, %v398
        %v403 = vsub.f32 %v399, %v401
        %v404 = vsub.f32 %v400, %v402
        %v405 = vmax.f32 %v403, 0.0
        %v406 = vmax.f32 %v404, 0.0
        %v407 = vld [vmem:[%s295] sm:$0xff]
        %v408 = vld [vmem:[%s295 + $0x8] sm:$0xff]
        %v409 = vld [vmem:[%s301] sm:$0xff]
        %v410 = vld [vmem:[%s301 + $0x8] sm:$0xff]
        %v411 = vadd.f32 %v405, 1e-05
        %v412 = vadd.f32 %v406, 1e-05
        %v413 = vrsqrt.pop %v411
        %v414 = vrsqrt.pop %v412
        %v415 = vmul.f32 %v413, %v407
        %v416 = vmul.f32 %v414, %v408
        %v417 = vmul.f32 %v397, %v415
        %v418 = vmul.f32 %v398, %v416
        %v419 = vsub.f32 %v409, %v417
        %v420 = vsub.f32 %v410, %v418
        %422 = vset.pattern.permute.xlu0 0
        %423 = vperm.xlu0 %422, %v415
        %v424 = vpop.permute.xlu0 %423
        %427 = vset.pattern.permute.xlu0 0
        %428 = vperm.xlu0 %427, %v416
        %v429 = vpop.permute.xlu0 %428
        %v431 = vmul.f32 %v312, %v424
        %v432 = vmul.f32 %v313, %v424
        %v433 = vmul.f32 %v314, %v429
        %v434 = vmul.f32 %v315, %v429
        %v435 = vmul.f32 %v316, %v424
        %v436 = vmul.f32 %v317, %v424
        %v437 = vmul.f32 %v318, %v429
        %v438 = vmul.f32 %v319, %v429
        %v439 = vmul.f32 %v320, %v424
        %v440 = vmul.f32 %v321, %v424
        %v441 = vmul.f32 %v322, %v429
        %v442 = vmul.f32 %v323, %v429
        %v443 = vmul.f32 %v324, %v424
        %v444 = vmul.f32 %v325, %v424
        %v445 = vmul.f32 %v326, %v429
        %v446 = vmul.f32 %v327, %v429
        %448 = vset.pattern.permute.xlu0 0
        %449 = vperm.xlu0 %448, %v419
        %v450 = vpop.permute.xlu0 %449
        %453 = vset.pattern.permute.xlu0 0
        %454 = vperm.xlu0 %453, %v420
        %v455 = vpop.permute.xlu0 %454
        %v457 = vadd.f32 %v431, %v450
        %v458 = vadd.f32 %v432, %v450
        %v459 = vadd.f32 %v433, %v455
        %v460 = vadd.f32 %v434, %v455
        %v461 = vadd.f32 %v435, %v450
        %v462 = vadd.f32 %v436, %v450
        %v463 = vadd.f32 %v437, %v455
        %v464 = vadd.f32 %v438, %v455
        %v465 = vadd.f32 %v439, %v450
        %v466 = vadd.f32 %v440, %v450
        %v467 = vadd.f32 %v441, %v455
        %v468 = vadd.f32 %v442, %v455
        %v469 = vadd.f32 %v443, %v450
        %v470 = vadd.f32 %v444, %v450
        %v471 = vadd.f32 %v445, %v455
        %v472 = vadd.f32 %v446, %v455
        %vm473 = vcmp.ge.f32.partialorder %v457, 0.0
        %vm474 = vcmp.ge.f32.partialorder %v458, 0.0
        %vm475 = vcmp.ge.f32.partialorder %v459, 0.0
        %vm476 = vcmp.ge.f32.partialorder %v460, 0.0
        %vm477 = vcmp.ge.f32.partialorder %v461, 0.0
        %vm478 = vcmp.ge.f32.partialorder %v462, 0.0
        %vm479 = vcmp.ge.f32.partialorder %v463, 0.0
        %vm480 = vcmp.ge.f32.partialorder %v464, 0.0
        %vm481 = vcmp.ge.f32.partialorder %v465, 0.0
        %vm482 = vcmp.ge.f32.partialorder %v466, 0.0
        %vm483 = vcmp.ge.f32.partialorder %v467, 0.0
        %vm484 = vcmp.ge.f32.partialorder %v468, 0.0
        %vm485 = vcmp.ge.f32.partialorder %v469, 0.0
        %vm486 = vcmp.ge.f32.partialorder %v470, 0.0
        %vm487 = vcmp.ge.f32.partialorder %v471, 0.0
        %vm488 = vcmp.ge.f32.partialorder %v472, 0.0
        %490 = vset.pattern.permute.xlu0 0
        %491 = vperm.xlu0 %490, %v310
        %v492 = vpop.permute.xlu0 %491
        %495 = vset.pattern.permute.xlu0 0
        %496 = vperm.xlu0 %495, %v311
        %v497 = vpop.permute.xlu0 %496
        %v499 = vmul.f32 %v457, %v492
        %v500 = vmul.f32 %v458, %v492
        %v501 = vmul.f32 %v459, %v497
        %v502 = vmul.f32 %v460, %v497
        %v503 = vmul.f32 %v461, %v492
        %v504 = vmul.f32 %v462, %v492
        %v505 = vmul.f32 %v463, %v497
        %v506 = vmul.f32 %v464, %v497
        %v507 = vmul.f32 %v465, %v492
        %v508 = vmul.f32 %v466, %v492
        %v509 = vmul.f32 %v467, %v497
        %v510 = vmul.f32 %v468, %v497
        %v511 = vmul.f32 %v469, %v492
        %v512 = vmul.f32 %v470, %v492
        %v513 = vmul.f32 %v471, %v497
        %v514 = vmul.f32 %v472, %v497
        %v515 = vsel %vm473, %v457, %v499
        %v516 = vsel %vm474, %v458, %v500
        %v517 = vsel %vm475, %v459, %v501
        %v518 = vsel %vm476, %v460, %v502
        %v519 = vsel %vm477, %v461, %v503
        %v520 = vsel %vm478, %v462, %v504
        %v521 = vsel %vm479, %v463, %v505
        %v522 = vsel %vm480, %v464, %v506
        %v523 = vsel %vm481, %v465, %v507
        %v524 = vsel %vm482, %v466, %v508
        %v525 = vsel %vm483, %v467, %v509
        %v526 = vsel %vm484, %v468, %v510
        %v527 = vsel %vm485, %v469, %v511
        %v528 = vsel %vm486, %v470, %v512
        %v529 = vsel %vm487, %v471, %v513
        %v530 = vsel %vm488, %v472, %v514
        %531 = vst [vmem:[%s289] sm:$0xff] %v515
        %532 = vst.msk [vmem:[%s289 + $0x8] sm:$0xff] %vm328, %v516
        %533 = vst [vmem:[%s289 + $0x10] sm:$0xff] %v517
        %534 = vst.msk [vmem:[%s289 + $0x18] sm:$0xff] %vm328, %v518
        %535 = vst [vmem:[%s289 + $0x20] sm:$0xff] %v519
        %536 = vst.msk [vmem:[%s289 + $0x28] sm:$0xff] %vm328, %v520
        %537 = vst [vmem:[%s289 + $0x30] sm:$0xff] %v521
        %538 = vst.msk [vmem:[%s289 + $0x38] sm:$0xff] %vm328, %v522
        %539 = vst [vmem:[%s289 + $0x40] sm:$0xff] %v523
        %540 = vst.msk [vmem:[%s289 + $0x48] sm:$0xff] %vm328, %v524
        %541 = vst [vmem:[%s289 + $0x50] sm:$0xff] %v525
        %542 = vst.msk [vmem:[%s289 + $0x58] sm:$0xff] %vm328, %v526
        %543 = vst [vmem:[%s289 + $0x60] sm:$0xff] %v527
        %544 = vst.msk [vmem:[%s289 + $0x68] sm:$0xff] %vm328, %v528
        %545 = vst [vmem:[%s289 + $0x70] sm:$0xff] %v529
        %546 = vst.msk [vmem:[%s289 + $0x78] sm:$0xff] %vm328, %v530
        %s547 = sand.u32 %s133, 1
        %s548 = scalar_lea.sflag [#allocation4], %s547
        %s549 = sand.u32 %s133, 1
        %s550 = smul.addr %s549, 128
        %s551 = scalar_lea.vmem [#allocation5], %s550
        // Predicated region
        $region41: #{tpu_custom_call.1} parent=35 // pred_check
          %p552 = pneg %p143
        $region42: #{tpu_custom_call.1} parent=35 // pred_check_branch
          %554 = sbr.rel (%p552) target = $region44
        $region43: #{tpu_custom_call.1} parent=35 // pred_region
          #allocation9 [shape = 'u32[6]{0}', space=smem, size = 0x18, scoped, tag = 'DMA stride descriptor']
          %s555 = smul.u32 2, %s21
          %s557 = ssub.s32 2048, 2048
          %558 = vsyncadd %s548, %s557
          %s559 = smul.addr %s555, 2
          %s560 = smul.addr %s559, 128
          %s561 = scalar_lea.hbm %s4, %s560
          %s563 = sshll.u32 1, 14
          %s564 = sxor.u32 4294967295, %s563
          %s567 = sshll.u32 7, 18
          %s568 = sxor.u32 4294967295, %s567
          %s569 = sand.u32 0, %s568
          %s571 = sor.u32 %s569, 0
          %s573 = sshll.u32 3, 24
          %s574 = sxor.u32 4294967295, %s573
          %s575 = sand.u32 %s571, %s574
          %s577 = sor.u32 %s575, 0
          %s578 = sshll.u32 %s551, 4
          %s579 = int_to_ptr.vmem [resolvable:$true] %s578
          %585 = sst [smem:[#allocation9]] 512
          %s586 = scalar_lea.smem [#allocation9], 1
          %587 = sst [smem:[%s586]] 1024
          %s588 = scalar_lea.smem [#allocation9], 2
          %589 = sst [smem:[%s588]] 2
          %s590 = scalar_lea.smem [#allocation9], 3
          %591 = sst [smem:[%s590]] 256
          %s592 = scalar_lea.smem [#allocation9], 4
          %593 = sst [smem:[%s592]] 256
          %s594 = scalar_lea.smem [#allocation9], 5
          %595 = sst [smem:[%s594]] 16
          %597 = dma.general %s579, 2048, %s561, %s548, [#allocation8], [#allocation9], %s577, 0
        $region44: #{tpu_custom_call.1} parent=35 // pred_fallthru
          _
      $region36: #{tpu_custom_call.1} parent=5 // pred_fallthru
        _
      %p598 = scmp.le.s32.totalorder 2, %s16
      // Predicated region
      $region45: #{tpu_custom_call.1} parent=5 // pred_check
        %p599 = pneg %p598
      $region46: #{tpu_custom_call.1} parent=5 // pred_check_branch
        %601 = sbr.rel (%p599) target = $region48
      $region47: #{tpu_custom_call.1} parent=5 // pred_region
        %s602 = ssub.s32 %s16, 2
        // Predicated region
        $region49: #{tpu_custom_call.1} parent=47 // pred_check
          %p603 = pneg %p149
        $region50: #{tpu_custom_call.1} parent=47 // pred_check_branch
          %605 = sbr.rel (%p603) target = $region52
        $region51: #{tpu_custom_call.1} parent=47 // pred_region
          %s606 = sand.u32 %s134, 1
          %s607 = scalar_lea.sflag [#allocation4], %s606
          %s608 = sand.u32 %s134, 1
          %s609 = smul.addr %s608, 128
          %s610 = scalar_lea.vmem [#allocation5], %s609
          %611 = dma.done %s607, 2048
        $region52: #{tpu_custom_call.1} parent=47 // pred_fallthru
          _
      $region48: #{tpu_custom_call.1} parent=5 // pred_fallthru
        _
    $region6: #{tpu_custom_call.1} parent=1 // loop_footer
      %s20 = sadd.s32 1, %s16
    $region7: #{tpu_custom_call.1} parent=1 // loop_footer_branch
      %15 = sbr.rel target = $region3
    $region8: #{tpu_custom_call.1} parent=1 // loop_exit
      _
    %612 = vsyncpa [#allocation3], 1
    %s613 = scalar_lea.sflag [#allocation3], 1
    %614 = vsyncpa %s613, 1
    %615 = vsyncpa [#allocation4], 1
    %s616 = scalar_lea.sflag [#allocation4], 1
    %617 = vsyncpa %s616, 1

</llo_original>
